<compile_context>
chip_gen: v7x
topology: tpu7x:2x2x1
jax: 0.10.0
libtpu: 0.0.40
codegen_flags: <defaults>
</compile_context>

<pallas_src>
import functools

import jax
import jax.numpy as jnp
from jax import lax
from jax.experimental import pallas as pl
from jax.experimental.pallas import tpu as pltpu

LANE = 128
MAX_TILE_ROWS = 1024   # (1024,128) f32 block = 512 KiB / operand / buffer.
NUM_CORES = 2          # leading "parallel" axis: both TensorCores on v7x.
OUT_ROWS = 8           # per-core output tile = one (8,128) f32 vreg.


def _layer_loss_kernel(ori_ref, new_ref, grad_ref, out_ref, acc_ref, *,
                       tile_rows, rows_valid, tiles_per_core, needs_mask):
    c = pl.program_id(0)   # core (parallel) index
    i = pl.program_id(1)   # sequential reduction index

    @pl.when(i == 0)
    def _():
        acc_ref[...] = jnp.zeros_like(acc_ref)

    # Pure streaming VPU work per step: cast, subtract, multiply, accumulate.
    diff = new_ref[...].astype(jnp.float32) - ori_ref[...].astype(jnp.float32)
    prod = diff * grad_ref[...].astype(jnp.float32)

    if needs_mask:
        # Zero rows past the end of the real array: the partial last block and
        # the fully-out-of-range block a core gets when the tile count is odd.
        # Uses the *unclamped* block index so duplicated (clamped) DMAs are
        # fully masked out.
        block_idx = c * tiles_per_core + i
        row_ids = block_idx * tile_rows + lax.broadcasted_iota(
            jnp.int32, (tile_rows, LANE), 0)
        prod = jnp.where(row_ids < rows_valid, prod, 0.0)

    acc_ref[...] += prod

    @pl.when(i == pl.num_programs(1) - 1)
    def _():
        # One reduction per core: tree-fold (tile_rows,128) -> (8,128) with
        # sublane-aligned static slices + elementwise adds (VPU only).
        x = acc_ref[...]
        r = tile_rows
        while r > OUT_ROWS:
            r //= 2
            x = x[:r, :] + x[r:, :]
        out_ref[...] = x


def layer_loss(ori_output, new_output, grad):
    """Pallas equivalent of (new_output - ori_output).view(-1).dot(grad.view(-1))."""
    a = ori_output.reshape(-1)
    b = new_output.reshape(-1)
    g = grad.reshape(-1)

    n = a.shape[0]
    rows_full = n // LANE
    n_aligned = rows_full * LANE

    # The (<128 element) unaligned tail is handled in plain JAX, so no
    # host-side padding copies of the full arrays are ever materialized.
    tail = jnp.float32(0.0)
    if n_aligned < n:
        tail = jnp.dot(
            b[n_aligned:].astype(jnp.float32) - a[n_aligned:].astype(jnp.float32),
            g[n_aligned:].astype(jnp.float32))

    if rows_full == 0:
        return tail

    # Lane-dense [rows, 128] view of the aligned prefix, streamed in native dtype.
    a2 = a[:n_aligned].reshape(rows_full, LANE)
    b2 = b[:n_aligned].reshape(rows_full, LANE)
    g2 = g[:n_aligned].reshape(rows_full, LANE)

    # Tile rows: power of two in [8, MAX_TILE_ROWS] so the final tree-fold
    # lands exactly on an (8,128) tile and small inputs don't over-allocate.
    tile_rows = min(MAX_TILE_ROWS, max(OUT_ROWS, pl.next_power_of_2(rows_full)))

    num_tiles = pl.cdiv(rows_full, tile_rows)
    tiles_per_core = pl.cdiv(num_tiles, NUM_CORES)
    needs_mask = (NUM_CORES * tiles_per_core * tile_rows) > rows_full

    def in_map(c, i):
        # Clamp so a core's (fully masked) overflow step never DMAs out of range.
        return (jnp.minimum(c * tiles_per_core + i, num_tiles - 1), 0)

    in_spec = pl.BlockSpec((tile_rows, LANE), in_map)

    kernel = functools.partial(
        _layer_loss_kernel,
        tile_rows=tile_rows,
        rows_valid=rows_full,
        tiles_per_core=tiles_per_core,
        needs_mask=needs_mask,
    )

    partials = pl.pallas_call(
        kernel,
        out_shape=jax.ShapeDtypeStruct((NUM_CORES * OUT_ROWS, LANE), jnp.float32),
        grid_spec=pltpu.PrefetchScalarGridSpec(
            num_scalar_prefetch=0,
            grid=(NUM_CORES, tiles_per_core),
            in_specs=[in_spec, in_spec, in_spec],
            out_specs=pl.BlockSpec((OUT_ROWS, LANE), lambda c, i: (c, 0)),
            scratch_shapes=[pltpu.VMEM((tile_rows, LANE), jnp.float32)],
        ),
        compiler_params=pltpu.CompilerParams(
            dimension_semantics=("parallel", "arbitrary"),
        ),
    )(a2, b2, g2)

    # Tiny (NUM_CORES*8, 128) partial-sum slab -> scalar, plus the unaligned tail.
    return jnp.sum(partials) + tail


def _check(shape, key):
    k1, k2, k3 = jax.random.split(key, 3)
    ori = jax.random.normal(k1, shape, dtype=jnp.float32)
    new = jax.random.normal(k2, shape, dtype=jnp.float32)
    grd = jax.random.normal(k3, shape, dtype=jnp.float32)

    loss = jax.block_until_ready(layer_loss(ori, new, grd))
    ref = jnp.dot((new - ori).reshape(-1), grd.reshape(-1))
    assert jnp.allclose(loss, ref, rtol=1e-4, atol=1e-4), (shape, loss, ref)


if __name__ == "__main__":
    key = jax.random.PRNGKey(0)
    k_a, k_b = jax.random.split(key)

    # Small NCHW shape consistent with a conv-layer output.
    _check((2, 4, 16, 16), k_a)
    # Odd size: exercises the unaligned tail, masked partial tile, and the
    # clamped / fully-masked overflow tile on the second core.
    _check((2, 3, 229, 229), k_b)

    print("KERNEL_OK")
</pallas_src>

<mosaic_0001>
module attributes {stable_mosaic.version = 11 : i64} {
  func.func @_layer_loss_kernel(%arg0: i32, %arg1: i32, %arg2: memref<16x128xf32, #tpu.memory_space<vmem>>, %arg3: memref<16x128xf32, #tpu.memory_space<vmem>>, %arg4: memref<16x128xf32, #tpu.memory_space<vmem>>, %arg5: memref<8x128xf32, #tpu.memory_space<vmem>>, %arg6: memref<16x128xf32, #tpu.memory_space<vmem>>) attributes {dimension_semantics = [#tpu.dimension_semantics<parallel>, #tpu.dimension_semantics<arbitrary>], iteration_bounds = array<i64: 2, 1>, scalar_prefetch = 0 : i64, scratch_operands = 1 : i64, tpu.core_type = #tpu.core_type<tc>, window_params = [{transform_indices = @transform_0, window_bounds = array<i64: 16, 128>}, {transform_indices = @transform_1, window_bounds = array<i64: 16, 128>}, {transform_indices = @transform_2, window_bounds = array<i64: 16, 128>}, {transform_indices = @transform_3, window_bounds = array<i64: 8, 128>}]} {
    %c0_i32 = arith.constant 0 : i32
    %0 = arith.cmpi eq, %arg1, %c0_i32 : i32
    %1 = arith.extui %0 : i1 to i32
    %c0_i32_0 = arith.constant 0 : i32
    %2 = arith.cmpi ne, %1, %c0_i32_0 : i32
    scf.if %2 {
      %cst_13 = arith.constant 0.000000e+00 : f32
      %24 = vector.broadcast %cst_13 : f32 to vector<16x128xf32>
      %c0_14 = arith.constant 0 : index
      %c0_15 = arith.constant 0 : index
      %25 = vector.load %arg6[%c0_14, %c0_15] : memref<16x128xf32, #tpu.memory_space<vmem>>, vector<16x128xf32>
      tpu.vector_store %arg6[%c0_14, %c0_15], %24 {strides = array<i32>} : memref<16x128xf32, #tpu.memory_space<vmem>>, vector<16x128xf32>,
    } else {
    }
    %c0 = arith.constant 0 : index
    %c0_1 = arith.constant 0 : index
    %3 = vector.load %arg3[%c0, %c0_1] : memref<16x128xf32, #tpu.memory_space<vmem>>, vector<16x128xf32>
    %c0_2 = arith.constant 0 : index
    %c0_3 = arith.constant 0 : index
    %4 = vector.load %arg2[%c0_2, %c0_3] : memref<16x128xf32, #tpu.memory_space<vmem>>, vector<16x128xf32>
    %5 = arith.subf %3, %4 : vector<16x128xf32>
    %c0_4 = arith.constant 0 : index
    %c0_5 = arith.constant 0 : index
    %6 = vector.load %arg4[%c0_4, %c0_5] : memref<16x128xf32, #tpu.memory_space<vmem>>, vector<16x128xf32>
    %7 = arith.mulf %5, %6 : vector<16x128xf32>
    %c1_i32 = arith.constant 1 : i32
    %8 = arith.muli %arg0, %c1_i32 : i32
    %9 = arith.addi %8, %arg1 : i32
    %c16_i32 = arith.constant 16 : i32
    %10 = arith.muli %9, %c16_i32 : i32
    %11 = tpu.iota {dimensions = array<i32: 0>} : vector<16x128xi32>
    %12 = vector.broadcast %10 : i32 to vector<16x128xi32>
    %13 = arith.addi %12, %11 : vector<16x128xi32>
    %c16_i32_6 = arith.constant 16 : i32
    %14 = vector.broadcast %c16_i32_6 : i32 to vector<16x128xi32>
    %15 = arith.cmpi slt, %13, %14 : vector<16x128xi32>
    %cst = arith.constant 0.000000e+00 : f32
    %16 = vector.broadcast %cst : f32 to vector<16x128xf32>
    %17 = arith.select %15, %7, %16 : vector<16x128xi1>, vector<16x128xf32>
    %c0_7 = arith.constant 0 : index
    %c0_8 = arith.constant 0 : index
    %18 = vector.load %arg6[%c0_7, %c0_8] : memref<16x128xf32, #tpu.memory_space<vmem>>, vector<16x128xf32>
    %19 = arith.addf %18, %17 : vector<16x128xf32>
    %c0_9 = arith.constant 0 : index
    %c0_10 = arith.constant 0 : index
    %20 = vector.load %arg6[%c0_9, %c0_10] : memref<16x128xf32, #tpu.memory_space<vmem>>, vector<16x128xf32>
    tpu.vector_store %arg6[%c0_9, %c0_10], %19 {strides = array<i32>} : memref<16x128xf32, #tpu.memory_space<vmem>>, vector<16x128xf32>,
    %c0_i32_11 = arith.constant 0 : i32
    %21 = arith.cmpi eq, %arg1, %c0_i32_11 : i32
    %22 = arith.extui %21 : i1 to i32
    %c0_i32_12 = arith.constant 0 : i32
    %23 = arith.cmpi ne, %22, %c0_i32_12 : i32
    scf.if %23 {
      %c0_13 = arith.constant 0 : index
      %c0_14 = arith.constant 0 : index
      %24 = vector.load %arg6[%c0_13, %c0_14] : memref<16x128xf32, #tpu.memory_space<vmem>>, vector<16x128xf32>
      %25 = vector.extract_strided_slice %24 {offsets = [0, 0], sizes = [8, 128], strides = [1, 1]} : vector<16x128xf32> to vector<8x128xf32>
      %26 = vector.extract_strided_slice %24 {offsets = [8, 0], sizes = [8, 128], strides = [1, 1]} : vector<16x128xf32> to vector<8x128xf32>
      %27 = arith.addf %25, %26 : vector<8x128xf32>
      %c0_15 = arith.constant 0 : index
      %c0_16 = arith.constant 0 : index
      %28 = vector.load %arg5[%c0_15, %c0_16] : memref<8x128xf32, #tpu.memory_space<vmem>>, vector<8x128xf32>
      tpu.vector_store %arg5[%c0_15, %c0_16], %27 {strides = array<i32>} : memref<8x128xf32, #tpu.memory_space<vmem>>, vector<8x128xf32>,
    } else {
    }
    return
  }
  func.func @transform_0(%arg0: i32, %arg1: i32) -> (i32, i32) {
    %c1_i32 = arith.constant 1 : i32
    %0 = arith.muli %arg0, %c1_i32 : i32
    %1 = arith.addi %0, %arg1 : i32
    %c0_i32 = arith.constant 0 : i32
    %2 = arith.minsi %1, %c0_i32 : i32
    %c0_i32_0 = arith.constant 0 : i32
    %c0_i32_1 = arith.constant 0 : i32
    return %2, %c0_i32_0 : i32, i32
  }
  func.func @transform_1(%arg0: i32, %arg1: i32) -> (i32, i32) {
    %c1_i32 = arith.constant 1 : i32
    %0 = arith.muli %arg0, %c1_i32 : i32
    %1 = arith.addi %0, %arg1 : i32
    %c0_i32 = arith.constant 0 : i32
    %2 = arith.minsi %1, %c0_i32 : i32
    %c0_i32_0 = arith.constant 0 : i32
    %c0_i32_1 = arith.constant 0 : i32
    return %2, %c0_i32_0 : i32, i32
  }
  func.func @transform_2(%arg0: i32, %arg1: i32) -> (i32, i32) {
    %c1_i32 = arith.constant 1 : i32
    %0 = arith.muli %arg0, %c1_i32 : i32
    %1 = arith.addi %0, %arg1 : i32
    %c0_i32 = arith.constant 0 : i32
    %2 = arith.minsi %1, %c0_i32 : i32
    %c0_i32_0 = arith.constant 0 : i32
    %c0_i32_1 = arith.constant 0 : i32
    return %2, %c0_i32_0 : i32, i32
  }
  func.func @transform_3(%arg0: i32, %arg1: i32) -> (i32, i32) {
    %c0_i32 = arith.constant 0 : i32
    %c0_i32_0 = arith.constant 0 : i32
    return %arg0, %c0_i32 : i32, i32
  }
}

</mosaic_0001>

<llo_original>
// kernel: tpu_custom_call.1
$region0: #{tpu_custom_call.1}
  #allocation0 [shape = 'u32[]', space=smem, size = 0x4, offset = 0x4, fixed_abs, tag = 'smem constant byte address 0x4 - core index']
  #allocation1 [shape = 'u32[144,128]{1,0:T(1,128)}', space=vmem, size = 0x12000, scoped, tag = 'internal scratch']
  #allocation2 [shape = 'f32[16,128]{1,0:T(8,128)}', space=vmem, size = 0x2000, scoped, tag = 'scratch operand']
  %s0 = inlined_call_operand.hbm [shape: f32[16,128], index: 0, kind: input, shape index: {}]
  %s1 = inlined_call_operand.hbm [shape: f32[16,128], index: 1, kind: input, shape index: {}]
  %s2 = inlined_call_operand.hbm [shape: f32[16,128], index: 2, kind: input, shape index: {}]
  %s3 = inlined_call_operand.hbm [shape: f32[16,128], index: 3, kind: output, shape index: {}]
  %s4 = sld [smem:[#allocation0]]
  $region65: #{tpu_custom_call.1} parent=0
    _
  %s6 = ssub.s32 1, %s4
  %s7 = scalar_select 0, %s6, %s4
  $region1: #{tpu_custom_call.1} parent=0
    #allocation3 [shape = 'u8[16384]{0}', space=vmem, size = 0x4000, scoped, tag = 'input window, operand 0']
    #allocation4 [shape = 's32[2]{0}', space=sflag, size = 0x8, scoped, tag = 'scoped memory for tpu_custom_call.1']
    #allocation5 [shape = 's32[2]{0}', space=sflag, size = 0x8, scoped, tag = 'scoped memory for tpu_custom_call.1']
    #allocation6 [shape = 'u8[16384]{0}', space=vmem, size = 0x4000, scoped, tag = 'input window, operand 1']
    #allocation7 [shape = 's32[2]{0}', space=sflag, size = 0x8, scoped, tag = 'scoped memory for tpu_custom_call.1']
    #allocation8 [shape = 'u8[16384]{0}', space=vmem, size = 0x4000, scoped, tag = 'input window, operand 2']
    #allocation9 [shape = 'u8[8192]{0}', space=vmem, size = 0x2000, scoped, tag = 'output window, operand 0']
    %8 = vsyncpa [#allocation4], 0
    %s9 = scalar_lea.sflag [#allocation4], 1
    %10 = vsyncpa %s9, 0
    %11 = vsyncpa [#allocation7], 0
    %s12 = scalar_lea.sflag [#allocation7], 1
    %13 = vsyncpa %s12, 0
    %14 = vsyncpa [#allocation5], 0
    %s15 = scalar_lea.sflag [#allocation5], 1
    %16 = vsyncpa %s15, 0
    loop: start=0, step=1, limit=4
    $region2: #{tpu_custom_call.1} parent=1 // loop_pre_header
      _
    $region3: #{tpu_custom_call.1} parent=1 // loop_header
      %s18 = sphi 0, %s22
      %p19 = scmp.ge.s32.totalorder %s18, 4
      %s25 = sphi 0, %s37
      %s26 = sphi 0, %s33
      %s27 = sphi 0, %s25
      %s28 = sphi 0, %s26
      %s29 = sphi 0, %s27
      %s30 = sphi 0, %s28
      %s46 = sphi 0, %s48
      %s49 = sphi 0, %s46
      %s50 = sphi 0, %s49
      %s66 = sphi 0, %s50
      %s78 = sphi 0, %s80
      %s81 = sphi 0, %s78
      %s82 = sphi 0, %s81
      %s98 = sphi 0, %s82
      %s110 = sphi 0, %s112
      %s113 = sphi 0, %s110
      %s114 = sphi 0, %s113
      %s130 = sphi 0, %s114
      %s136 = sphi 0, %s138
      %s139 = sphi 0, %s136
      %s140 = sphi 0, %s139
      %s156 = sphi 0, %s140
    $region4: #{tpu_custom_call.1} parent=1 // loop_header_branch
      %21 = sbr.rel (%p19) target = $region8
    $region5: #{tpu_custom_call.1} parent=1 // loop_body
      %s23 = ssub.s32 %s18, 1
      %s24 = ssub.s32 %s18, 2
      %s31 = sadd.s32 1, %s26
      %p32 = scmp.ge.s32.totalorder %s31, 1
      %s33 = scalar_select %p32, 0, %s31
      %s34 = sadd.s32 1, %s25
      %s35 = scalar_select %p32, %s34, %s25
      %p36 = scmp.ge.s32.totalorder %s35, 2
      %s37 = scalar_select %p36, 0, %s35
      %s38 = sadd.s32 %s25, %s26
      %p39 = scmp.lt.s32.totalorder %s38, 0
      %s40 = scalar_select %p39, %s38, 0
      %s41 = sadd.s32 %s37, %s33
      %p42 = scmp.lt.s32.totalorder %s41, 0
      %s43 = scalar_select %p42, %s41, 0
      %s44 = ssub.s32 %s40, %s43
      %p45 = scmp.eq.s32.totalorder %s44, 0
      %s47 = sadd.s32 %s46, 1
      %s48 = scalar_select %p45, %s46, %s47
      %p51 = pneg %p45
      %p52 = scmp.eq.s32.totalorder %s18, 1
      %p53 = por %p51, %p52
      %p54 = scmp.ne.s32.totalorder %s46, %s49
      %p55 = scmp.eq.s32.totalorder %s18, 0
      %p56 = por %p54, %p55
      %p57 = scmp.ne.s32.totalorder %s46, %s49
      %p58 = scmp.eq.s32.totalorder %s23, 1
      %p59 = por %p57, %p58
      %p60 = scmp.ne.s32.totalorder %s49, %s50
      %p61 = scmp.eq.s32.totalorder %s23, 0
      %p62 = por %p60, %p61
      %p63 = scmp.ne.s32.totalorder %s49, %s50
      %p64 = scmp.eq.s32.totalorder %s24, 1
      %p65 = por %p63, %p64
      %p67 = scmp.ne.s32.totalorder %s50, %s66
      %p68 = scmp.eq.s32.totalorder %s24, 0
      %p69 = por %p67, %p68
      %s70 = sadd.s32 %s25, %s26
      %p71 = scmp.lt.s32.totalorder %s70, 0
      %s72 = scalar_select %p71, %s70, 0
      %s73 = sadd.s32 %s37, %s33
      %p74 = scmp.lt.s32.totalorder %s73, 0
      %s75 = scalar_select %p74, %s73, 0
      %s76 = ssub.s32 %s72, %s75
      %p77 = scmp.eq.s32.totalorder %s76, 0
      %s79 = sadd.s32 %s78, 1
      %s80 = scalar_select %p77, %s78, %s79
      %p83 = pneg %p77
      %p84 = scmp.eq.s32.totalorder %s18, 1
      %p85 = por %p83, %p84
      %p86 = scmp.ne.s32.totalorder %s78, %s81
      %p87 = scmp.eq.s32.totalorder %s18, 0
      %p88 = por %p86, %p87
      %p89 = scmp.ne.s32.totalorder %s78, %s81
      %p90 = scmp.eq.s32.totalorder %s23, 1
      %p91 = por %p89, %p90
      %p92 = scmp.ne.s32.totalorder %s81, %s82
      %p93 = scmp.eq.s32.totalorder %s23, 0
      %p94 = por %p92, %p93
      %p95 = scmp.ne.s32.totalorder %s81, %s82
      %p96 = scmp.eq.s32.totalorder %s24, 1
      %p97 = por %p95, %p96
      %p99 = scmp.ne.s32.totalorder %s82, %s98
      %p100 = scmp.eq.s32.totalorder %s24, 0
      %p101 = por %p99, %p100
      %s102 = sadd.s32 %s25, %s26
      %p103 = scmp.lt.s32.totalorder %s102, 0
      %s104 = scalar_select %p103, %s102, 0
      %s105 = sadd.s32 %s37, %s33
      %p106 = scmp.lt.s32.totalorder %s105, 0
      %s107 = scalar_select %p106, %s105, 0
      %s108 = ssub.s32 %s104, %s107
      %p109 = scmp.eq.s32.totalorder %s108, 0
      %s111 = sadd.s32 %s110, 1
      %s112 = scalar_select %p109, %s110, %s111
      %p115 = pneg %p109
      %p116 = scmp.eq.s32.totalorder %s18, 1
      %p117 = por %p115, %p116
      %p118 = scmp.ne.s32.totalorder %s110, %s113
      %p119 = scmp.eq.s32.totalorder %s18, 0
      %p120 = por %p118, %p119
      %p121 = scmp.ne.s32.totalorder %s110, %s113
      %p122 = scmp.eq.s32.totalorder %s23, 1
      %p123 = por %p121, %p122
      %p124 = scmp.ne.s32.totalorder %s113, %s114
      %p125 = scmp.eq.s32.totalorder %s23, 0
      %p126 = por %p124, %p125
      %p127 = scmp.ne.s32.totalorder %s113, %s114
      %p128 = scmp.eq.s32.totalorder %s24, 1
      %p129 = por %p127, %p128
      %p131 = scmp.ne.s32.totalorder %s114, %s130
      %p132 = scmp.eq.s32.totalorder %s24, 0
      %p133 = por %p131, %p132
      %s134 = ssub.s32 %s25, %s37
      %p135 = scmp.eq.s32.totalorder %s134, 0
      %s137 = sadd.s32 %s136, 1
      %s138 = scalar_select %p135, %s136, %s137
      %p141 = pneg %p135
      %p142 = scmp.eq.s32.totalorder %s18, 1
      %p143 = por %p141, %p142
      %p144 = scmp.ne.s32.totalorder %s136, %s139
      %p145 = scmp.eq.s32.totalorder %s18, 0
      %p146 = por %p144, %p145
      %p147 = scmp.ne.s32.totalorder %s136, %s139
      %p148 = scmp.eq.s32.totalorder %s23, 1
      %p149 = por %p147, %p148
      %p150 = scmp.ne.s32.totalorder %s139, %s140
      %p151 = scmp.eq.s32.totalorder %s23, 0
      %p152 = por %p150, %p151
      %p153 = scmp.ne.s32.totalorder %s139, %s140
      %p154 = scmp.eq.s32.totalorder %s24, 1
      %p155 = por %p153, %p154
      %p157 = scmp.ne.s32.totalorder %s140, %s156
      %p158 = scmp.eq.s32.totalorder %s24, 0
      %p159 = por %p157, %p158
      %p160 = scmp.le.s32.totalorder 1, %s18
      %p161 = scmp.lt.s32.totalorder %s18, 3
      %p162 = pnand %p160, %p161
      %p163 = pneg %p162
      // Predicated region
      $region9: #{tpu_custom_call.1} parent=5 // pred_check
        _
      $region10: #{tpu_custom_call.1} parent=5 // pred_check_branch
        %165 = sbr.rel (%p162) target = $region12
      $region11: #{tpu_custom_call.1} parent=5 // pred_region
        %s166 = ssub.s32 %s18, 1
      $region12: #{tpu_custom_call.1} parent=5 // pred_fallthru
        _
      %p167 = scmp.lt.s32.totalorder %s18, 2
      // Predicated region
      $region13: #{tpu_custom_call.1} parent=5 // pred_check
        %p168 = pneg %p167
      $region14: #{tpu_custom_call.1} parent=5 // pred_check_branch
        %170 = sbr.rel (%p168) target = $region16
      $region15: #{tpu_custom_call.1} parent=5 // pred_region
        // Predicated region
        $region17: #{tpu_custom_call.1} parent=15 // pred_check
          %p171 = pneg %p56
        $region18: #{tpu_custom_call.1} parent=15 // pred_check_branch
          %173 = sbr.rel (%p171) target = $region20
        $region19: #{tpu_custom_call.1} parent=15 // pred_region
          %s174 = sand.u32 %s46, 1
          %s175 = scalar_lea.sflag [#allocation4], %s174
          %s176 = sand.u32 %s46, 1
          %s177 = smul.addr %s176, 16
          %s178 = scalar_lea.vmem [#allocation3], %s177
          %s179 = sadd.s32 %s25, %s26
          %p180 = scmp.lt.s32.totalorder %s179, 0
          %s181 = scalar_select %p180, %s179, 0
          %s182 = smul.u32 2, %s181
          %s184 = ssub.s32 256, 256
          %185 = vsyncadd %s175, %s184
          %s186 = smul.addr %s182, 128
          %s187 = scalar_lea.hbm %s0, %s186
          %s188 = sshll.u32 %s178, 4
          %s189 = int_to_ptr.vmem [resolvable:$true] %s188
          %194 = dma.hbm_to_vmem [thread:$0]  %s187, 256, %s189, %s175, 128, 128, 8
        $region20: #{tpu_custom_call.1} parent=15 // pred_fallthru
          _
        // Predicated region
        $region21: #{tpu_custom_call.1} parent=15 // pred_check
          %p195 = pneg %p88
        $region22: #{tpu_custom_call.1} parent=15 // pred_check_branch
          %197 = sbr.rel (%p195) target = $region24
        $region23: #{tpu_custom_call.1} parent=15 // pred_region
          %s198 = sand.u32 %s18, 1
          %s199 = scalar_lea.sflag [#allocation7], %s198
          %s200 = sand.u32 %s78, 1
          %s201 = smul.addr %s200, 16
          %s202 = scalar_lea.vmem [#allocation6], %s201
          %s203 = sadd.s32 %s25, %s26
          %p204 = scmp.lt.s32.totalorder %s203, 0
          %s205 = scalar_select %p204, %s203, 0
          %s206 = smul.u32 2, %s205
          %s208 = ssub.s32 256, 256
          %209 = vsyncadd %s199, %s208
          %s210 = smul.addr %s206, 128
          %s211 = scalar_lea.hbm %s1, %s210
          %s212 = sshll.u32 %s202, 4
          %s213 = int_to_ptr.vmem [resolvable:$true] %s212
          %218 = dma.hbm_to_vmem [thread:$0]  %s211, 256, %s213, %s199, 128, 128, 8
        $region24: #{tpu_custom_call.1} parent=15 // pred_fallthru
          _
        // Predicated region
        $region25: #{tpu_custom_call.1} parent=15 // pred_check
          %p219 = pneg %p120
        $region26: #{tpu_custom_call.1} parent=15 // pred_check_branch
          %221 = sbr.rel (%p219) target = $region28
        $region27: #{tpu_custom_call.1} parent=15 // pred_region
          %s222 = sand.u32 %s18, 1
          %s223 = scalar_lea.sflag [#allocation7], %s222
          %s224 = sand.u32 %s110, 1
          %s225 = smul.addr %s224, 16
          %s226 = scalar_lea.vmem [#allocation8], %s225
          %s227 = sadd.s32 %s25, %s26
          %p228 = scmp.lt.s32.totalorder %s227, 0
          %s229 = scalar_select %p228, %s227, 0
          %s230 = smul.u32 2, %s229
          %s232 = ssub.s32 256, 256
          %233 = vsyncadd %s223, %s232
          %s234 = smul.addr %s230, 128
          %s235 = scalar_lea.hbm %s2, %s234
          %s236 = sshll.u32 %s226, 4
          %s237 = int_to_ptr.vmem [resolvable:$true] %s236
          %242 = dma.hbm_to_vmem [thread:$0]  %s235, 256, %s237, %s223, 128, 128, 8
        $region28: #{tpu_custom_call.1} parent=15 // pred_fallthru
          _
      $region16: #{tpu_custom_call.1} parent=5 // pred_fallthru
        _
      %p243 = scmp.le.s32.totalorder 1, %s18
      %p244 = scmp.lt.s32.totalorder %s18, 3
      %p245 = pnand %p243, %p244
      %p246 = pneg %p245
      // Predicated region
      $region29: #{tpu_custom_call.1} parent=5 // pred_check
        _
      $region30: #{tpu_custom_call.1} parent=5 // pred_check_branch
        %248 = sbr.rel (%p245) target = $region32
      $region31: #{tpu_custom_call.1} parent=5 // pred_region
        %s249 = ssub.s32 %s18, 1
        %s250 = sand.u32 %s49, 1
        %s251 = scalar_lea.sflag [#allocation4], %s250
        %s252 = sand.u32 %s49, 1
        %s253 = smul.addr %s252, 16
        %s254 = scalar_lea.vmem [#allocation3], %s253
        // Predicated region
        $region33: #{tpu_custom_call.1} parent=31 // pred_check
          %p255 = pneg %p62
        $region34: #{tpu_custom_call.1} parent=31 // pred_check_branch
          %257 = sbr.rel (%p255) target = $region36
        $region35: #{tpu_custom_call.1} parent=31 // pred_region
          %258 = dma.done %s251, 256
        $region36: #{tpu_custom_call.1} parent=31 // pred_fallthru
          _
        %s259 = sand.u32 %s23, 1
        %s260 = scalar_lea.sflag [#allocation7], %s259
        %s261 = sand.u32 %s81, 1
        %s262 = smul.addr %s261, 16
        %s263 = scalar_lea.vmem [#allocation6], %s262
        // Predicated region
        $region37: #{tpu_custom_call.1} parent=31 // pred_check
          %p264 = pneg %p94
        $region38: #{tpu_custom_call.1} parent=31 // pred_check_branch
          %266 = sbr.rel (%p264) target = $region40
        $region39: #{tpu_custom_call.1} parent=31 // pred_region
          %267 = dma.done %s260, 256
        $region40: #{tpu_custom_call.1} parent=31 // pred_fallthru
          _
        %s268 = sand.u32 %s23, 1
        %s269 = scalar_lea.sflag [#allocation7], %s268
        %s270 = sand.u32 %s113, 1
        %s271 = smul.addr %s270, 16
        %s272 = scalar_lea.vmem [#allocation8], %s271
        // Predicated region
        $region41: #{tpu_custom_call.1} parent=31 // pred_check
          %p273 = pneg %p126
        $region42: #{tpu_custom_call.1} parent=31 // pred_check_branch
          %275 = sbr.rel (%p273) target = $region44
        $region43: #{tpu_custom_call.1} parent=31 // pred_region
          %276 = dma.done %s269, 256
        $region44: #{tpu_custom_call.1} parent=31 // pred_fallthru
          _
        %s277 = sand.u32 %s49, 1
        %s278 = scalar_lea.sflag [#allocation4], %s277
        %s279 = sand.u32 %s49, 1
        %s280 = smul.addr %s279, 16
        %s281 = scalar_lea.vmem [#allocation3], %s280
        %p282 = pneg %p62
        %p283 = pneg %p59
        %s284 = sand.u32 %s23, 1
        %s285 = scalar_lea.sflag [#allocation7], %s284
        %s286 = sand.u32 %s81, 1
        %s287 = smul.addr %s286, 16
        %s288 = scalar_lea.vmem [#allocation6], %s287
        %p289 = pneg %p94
        %p290 = pneg %p91
        %s291 = sand.u32 %s23, 1
        %s292 = scalar_lea.sflag [#allocation7], %s291
        %s293 = sand.u32 %s113, 1
        %s294 = smul.addr %s293, 16
        %s295 = scalar_lea.vmem [#allocation8], %s294
        %p296 = pneg %p126
        %p297 = pneg %p123
        %p298 = pneg %p152
        %p299 = pneg %p149
        %s300 = sand.u32 %s139, 1
        %s301 = scalar_lea.sflag [#allocation5], %s300
        %s302 = sand.u32 %s139, 1
        %s303 = smul.addr %s302, 8
        %s304 = scalar_lea.vmem [#allocation9], %s303
        %s305 = sadd.s32 %s27, %s28
        %p306 = scmp.lt.s32.totalorder %s305, 0
        %s307 = scalar_select %p306, %s305, 0
        %s308 = smul.u32 2, %s307
        %s309 = sadd.s32 %s27, %s28
        %p310 = scmp.lt.s32.totalorder %s309, 0
        %s311 = scalar_select %p310, %s309, 0
        %s312 = smul.u32 2, %s311
        %s313 = sadd.s32 %s27, %s28
        %p314 = scmp.lt.s32.totalorder %s313, 0
        %s315 = scalar_select %p314, %s313, 0
        %s316 = smul.u32 2, %s315
        %p317 = scmp.eq.s32.totalorder %s28, 0
        // Predicated region
        $region45: #{tpu_custom_call.1} parent=31 // pred_check
          %p318 = pneg %p317
        $region46: #{tpu_custom_call.1} parent=31 // pred_check_branch
          %320 = sbr.rel (%p318) target = $region48
        $region47: #{tpu_custom_call.1} parent=31 // pred_region
          %321 = vst [vmem:[#allocation2] sm:$0xff] 0.0
          %322 = vst [vmem:[#allocation2 + $0x8] sm:$0xff] 0.0
        $region48: #{tpu_custom_call.1} parent=31 // pred_fallthru
          _
        %v323 = vld [vmem:[%s263] sm:$0xff]
        %v324 = vld [vmem:[%s263 + $0x8] sm:$0xff]
        %v325 = vld [vmem:[%s254] sm:$0xff]
        %v326 = vld [vmem:[%s254 + $0x8] sm:$0xff]
        %v327 = vsub.f32 %v323, %v325
        %v328 = vsub.f32 %v324, %v326
        %v329 = vld [vmem:[%s272] sm:$0xff]
        %v330 = vld [vmem:[%s272 + $0x8] sm:$0xff]
        %v331 = vmul.f32 %v327, %v329
        %v332 = vmul.f32 %v328, %v330
        %s333 = sadd.s32 %s27, %s28
        %s334 = smul.u32 %s333, 16
        %v335 = vlaneseq
        %v336 = vshrl.u32 %v335, 7
        %v337 = vadd.s32 %v336, 8
        %v338 = vstv %s334
        %v339 = vadd.s32 %v338, %v336
        %v340 = vadd.s32 %v338, %v337
        %vm341 = vcmp.lt.s32.totalorder %v339, 16
        %vm342 = vcmp.lt.s32.totalorder %v340, 16
        %v343 = vsel %vm341, %v331, 0.0
        %v344 = vsel %vm342, %v332, 0.0
        %v345 = vld [vmem:[#allocation2] sm:$0xff]
        %v346 = vld [vmem:[#allocation2 + $0x8] sm:$0xff]
        %v347 = vadd.f32 %v345, %v343
        %v348 = vadd.f32 %v346, %v344
        %349 = vst [vmem:[#allocation2] sm:$0xff] %v347
        %350 = vst [vmem:[#allocation2 + $0x8] sm:$0xff] %v348
        // Predicated region
        $region49: #{tpu_custom_call.1} parent=31 // pred_check
          %p351 = pneg %p317
        $region50: #{tpu_custom_call.1} parent=31 // pred_check_branch
          %353 = sbr.rel (%p351) target = $region52
        $region51: #{tpu_custom_call.1} parent=31 // pred_region
          %v354 = vld [vmem:[#allocation2] sm:$0xff]
          %v355 = vld [vmem:[#allocation2 + $0x8] sm:$0xff]
          %v356 = vadd.f32 %v354, %v355
          %357 = vst [vmem:[%s304] sm:$0xff] %v356
        $region52: #{tpu_custom_call.1} parent=31 // pred_fallthru
          _
        %s358 = sand.u32 %s139, 1
        %s359 = scalar_lea.sflag [#allocation5], %s358
        %s360 = sand.u32 %s139, 1
        %s361 = smul.addr %s360, 8
        %s362 = scalar_lea.vmem [#allocation9], %s361
        // Predicated region
        $region53: #{tpu_custom_call.1} parent=31 // pred_check
          %p363 = pneg %p149
        $region54: #{tpu_custom_call.1} parent=31 // pred_check_branch
          %365 = sbr.rel (%p363) target = $region56
        $region55: #{tpu_custom_call.1} parent=31 // pred_region
          %s367 = ssub.s32 128, 128
          %368 = vsyncadd %s359, %s367
          %s369 = smul.addr %s27, 128
          %s370 = scalar_lea.hbm %s3, %s369
          %s372 = sshll.u32 %s362, 4
          %s373 = int_to_ptr.vmem [resolvable:$true] %s372
          %375 = dma.vmem_to_hbm [thread:$0]  %s373, 128, %s370, %s359
        $region56: #{tpu_custom_call.1} parent=31 // pred_fallthru
          _
      $region32: #{tpu_custom_call.1} parent=5 // pred_fallthru
        _
      %p376 = scmp.le.s32.totalorder 2, %s18
      // Predicated region
      $region57: #{tpu_custom_call.1} parent=5 // pred_check
        %p377 = pneg %p376
      $region58: #{tpu_custom_call.1} parent=5 // pred_check_branch
        %379 = sbr.rel (%p377) target = $region60
      $region59: #{tpu_custom_call.1} parent=5 // pred_region
        %s380 = ssub.s32 %s18, 2
        // Predicated region
        $region61: #{tpu_custom_call.1} parent=59 // pred_check
          %p381 = pneg %p155
        $region62: #{tpu_custom_call.1} parent=59 // pred_check_branch
          %383 = sbr.rel (%p381) target = $region64
        $region63: #{tpu_custom_call.1} parent=59 // pred_region
          %s384 = sand.u32 %s140, 1
          %s385 = scalar_lea.sflag [#allocation5], %s384
          %s386 = sand.u32 %s140, 1
          %s387 = smul.addr %s386, 8
          %s388 = scalar_lea.vmem [#allocation9], %s387
          %389 = dma.done %s385, 128
        $region64: #{tpu_custom_call.1} parent=59 // pred_fallthru
          _
      $region60: #{tpu_custom_call.1} parent=5 // pred_fallthru
        _
    $region6: #{tpu_custom_call.1} parent=1 // loop_footer
      %s22 = sadd.s32 1, %s18
    $region7: #{tpu_custom_call.1} parent=1 // loop_footer_branch
      %17 = sbr.rel target = $region3
    $region8: #{tpu_custom_call.1} parent=1 // loop_exit
      _
    %390 = vsyncpa [#allocation4], 1
    %s391 = scalar_lea.sflag [#allocation4], 1
    %392 = vsyncpa %s391, 1
    %393 = vsyncpa [#allocation7], 1
    %s394 = scalar_lea.sflag [#allocation7], 1
    %395 = vsyncpa %s394, 1
    %396 = vsyncpa [#allocation5], 1
    %s397 = scalar_lea.sflag [#allocation5], 1
    %398 = vsyncpa %s397, 1

</llo_original>
